<compile_context>
chip_gen: v5e
topology: v5e:2x2
jax: 0.10.0
libtpu: 0.0.40
codegen_flags: <defaults>
</compile_context>

<pallas_src>
import jax
import jax.numpy as jnp
from jax.experimental import pallas as pl
from jax.experimental.pallas import tpu as pltpu


def _clip_embed_kernel(tok_ref, emb_ref, pos_ref, out_ref):
    # tok_ref: (B*S,) int32 in SMEM (scalar-prefetched token ids).
    # emb_ref: (V, D) embedding table, VMEM-resident (constant block index).
    # pos_ref: (S, D) positional embedding, VMEM-resident.
    # out_ref: (1, S, D) output block for batch row b = program_id(0).
    b = pl.program_id(0)
    S, D = pos_ref.shape

    # Gather S rows from the VMEM-resident table (dynamic row slice per token),
    # then one vectorized add over the whole (S, D) = (8, 128)-aligned tile.
    rows = [emb_ref[pl.ds(tok_ref[b * S + s], 1), :] for s in range(S)]  # each (1, D)
    gathered = jnp.concatenate(rows, axis=0)                             # (S, D)
    out_ref[...] = (gathered + pos_ref[...]).reshape(out_ref.shape)


def clip_embedding(tokens, emb_table, pos_emb):
    """tokens: (B, S) int32, emb_table: (V, D), pos_emb: (S, D) -> (B, S, D)."""
    B, S = tokens.shape
    V, D = emb_table.shape
    assert pos_emb.shape == (S, D)
    assert pos_emb.dtype == emb_table.dtype

    # Flatten tokens -> 1-D SMEM layout (avoids [ceil(R/8)*8, ceil(C/128)*128]
    # 2-D SMEM padding for real batch/seq sizes).
    tok_flat = tokens.reshape(B * S).astype(jnp.int32)

    grid_spec = pltpu.PrefetchScalarGridSpec(
        num_scalar_prefetch=1,          # tokens land in SMEM, visible to the kernel
        grid=(B,),
        in_specs=[
            # Whole embedding table resident in VMEM (constant block index -> one DMA).
            pl.BlockSpec((V, D), lambda b, tok: (0, 0)),
            # Whole positional embedding resident in VMEM.
            pl.BlockSpec((S, D), lambda b, tok: (0, 0)),
        ],
        # One full (1, S, D) output block per batch row: dense (8, 128) stores.
        out_specs=pl.BlockSpec((1, S, D), lambda b, tok: (b, 0, 0)),
    )

    return pl.pallas_call(
        _clip_embed_kernel,
        out_shape=jax.ShapeDtypeStruct((B, S, D), emb_table.dtype),
        grid_spec=grid_spec,
        compiler_params=pltpu.CompilerParams(
            dimension_semantics=("parallel",)),
    )(tok_flat, emb_table, pos_emb)


if __name__ == "__main__":
    # Small shapes consistent with the module's forward:
    #   n_vocab=64, d_embedding=128 (lane-aligned), sequence_length=8, batch=2.
    n_vocab, d_embedding, seq_len, batch = 64, 128, 8, 2

    key = jax.random.PRNGKey(0)
    k_emb, k_pos, k_tok = jax.random.split(key, 3)

    # nn.Embedding weight: (n_vocab, d_embedding), N(0,1) init (deterministic here).
    emb_table = jax.random.normal(k_emb, (n_vocab, d_embedding), dtype=jnp.float32)
    # positional_embedding: (sequence_length, d_embedding). The PyTorch module
    # initializes it to zeros; we use a deterministic nonzero init so the add
    # path is actually exercised/verified.
    pos_emb = 0.01 * jax.random.normal(k_pos, (seq_len, d_embedding), dtype=jnp.float32)

    tokens = jax.random.randint(k_tok, (batch, seq_len), 0, n_vocab, dtype=jnp.int32)

    out = clip_embedding(tokens, emb_table, pos_emb)
    out = jax.block_until_ready(out)

    # Pure-JAX reference: embedding lookup + positional add (matches PyTorch forward).
    ref = emb_table[tokens] + pos_emb[None, :, :]
    assert out.shape == (batch, seq_len, d_embedding)
    assert jnp.allclose(out, ref, atol=1e-6, rtol=1e-6)

    print("KERNEL_OK")
</pallas_src>

<mosaic_0001>
module attributes {stable_mosaic.version = 11 : i64} {
  func.func @_clip_embed_kernel(%arg0: i32, %arg1: memref<16xi32, #tpu.memory_space<smem>>, %arg2: memref<64x128xf32, #tpu.memory_space<vmem>>, %arg3: memref<8x128xf32, #tpu.memory_space<vmem>>, %arg4: memref<1x8x128xf32, #tpu.memory_space<vmem>>) attributes {dimension_semantics = [#tpu.dimension_semantics<parallel>], iteration_bounds = array<i64: 2>, scalar_prefetch = 1 : i64, scratch_operands = 0 : i64, tpu.core_type = #tpu.core_type<tc>, window_params = [{pipeline_mode = #tpu.pipeline_mode<synchronous>, transform_indices = @transform_0, window_bounds = array<i64: 64, 128>}, {pipeline_mode = #tpu.pipeline_mode<synchronous>, transform_indices = @transform_1, window_bounds = array<i64: 8, 128>}, {transform_indices = @transform_2, window_bounds = array<i64: 1, 8, 128>}]} {
    %c8_i32 = arith.constant 8 : i32
    %0 = arith.muli %arg0, %c8_i32 : i32
    %c0_i32 = arith.constant 0 : i32
    %1 = arith.addi %0, %c0_i32 : i32
    %2 = arith.index_cast %1 : i32 to index
    %3 = memref.load %arg1[%2] : memref<16xi32, #tpu.memory_space<smem>>
    %4 = arith.index_cast %3 : i32 to index
    %c0 = arith.constant 0 : index
    %5 = vector.load %arg2[%4, %c0] : memref<64x128xf32, #tpu.memory_space<vmem>>, vector<1x128xf32>
    %c8_i32_0 = arith.constant 8 : i32
    %6 = arith.muli %arg0, %c8_i32_0 : i32
    %c1_i32 = arith.constant 1 : i32
    %7 = arith.addi %6, %c1_i32 : i32
    %8 = arith.index_cast %7 : i32 to index
    %9 = memref.load %arg1[%8] : memref<16xi32, #tpu.memory_space<smem>>
    %10 = arith.index_cast %9 : i32 to index
    %c0_1 = arith.constant 0 : index
    %11 = vector.load %arg2[%10, %c0_1] : memref<64x128xf32, #tpu.memory_space<vmem>>, vector<1x128xf32>
    %c8_i32_2 = arith.constant 8 : i32
    %12 = arith.muli %arg0, %c8_i32_2 : i32
    %c2_i32 = arith.constant 2 : i32
    %13 = arith.addi %12, %c2_i32 : i32
    %14 = arith.index_cast %13 : i32 to index
    %15 = memref.load %arg1[%14] : memref<16xi32, #tpu.memory_space<smem>>
    %16 = arith.index_cast %15 : i32 to index
    %c0_3 = arith.constant 0 : index
    %17 = vector.load %arg2[%16, %c0_3] : memref<64x128xf32, #tpu.memory_space<vmem>>, vector<1x128xf32>
    %c8_i32_4 = arith.constant 8 : i32
    %18 = arith.muli %arg0, %c8_i32_4 : i32
    %c3_i32 = arith.constant 3 : i32
    %19 = arith.addi %18, %c3_i32 : i32
    %20 = arith.index_cast %19 : i32 to index
    %21 = memref.load %arg1[%20] : memref<16xi32, #tpu.memory_space<smem>>
    %22 = arith.index_cast %21 : i32 to index
    %c0_5 = arith.constant 0 : index
    %23 = vector.load %arg2[%22, %c0_5] : memref<64x128xf32, #tpu.memory_space<vmem>>, vector<1x128xf32>
    %c8_i32_6 = arith.constant 8 : i32
    %24 = arith.muli %arg0, %c8_i32_6 : i32
    %c4_i32 = arith.constant 4 : i32
    %25 = arith.addi %24, %c4_i32 : i32
    %26 = arith.index_cast %25 : i32 to index
    %27 = memref.load %arg1[%26] : memref<16xi32, #tpu.memory_space<smem>>
    %28 = arith.index_cast %27 : i32 to index
    %c0_7 = arith.constant 0 : index
    %29 = vector.load %arg2[%28, %c0_7] : memref<64x128xf32, #tpu.memory_space<vmem>>, vector<1x128xf32>
    %c8_i32_8 = arith.constant 8 : i32
    %30 = arith.muli %arg0, %c8_i32_8 : i32
    %c5_i32 = arith.constant 5 : i32
    %31 = arith.addi %30, %c5_i32 : i32
    %32 = arith.index_cast %31 : i32 to index
    %33 = memref.load %arg1[%32] : memref<16xi32, #tpu.memory_space<smem>>
    %34 = arith.index_cast %33 : i32 to index
    %c0_9 = arith.constant 0 : index
    %35 = vector.load %arg2[%34, %c0_9] : memref<64x128xf32, #tpu.memory_space<vmem>>, vector<1x128xf32>
    %c8_i32_10 = arith.constant 8 : i32
    %36 = arith.muli %arg0, %c8_i32_10 : i32
    %c6_i32 = arith.constant 6 : i32
    %37 = arith.addi %36, %c6_i32 : i32
    %38 = arith.index_cast %37 : i32 to index
    %39 = memref.load %arg1[%38] : memref<16xi32, #tpu.memory_space<smem>>
    %40 = arith.index_cast %39 : i32 to index
    %c0_11 = arith.constant 0 : index
    %41 = vector.load %arg2[%40, %c0_11] : memref<64x128xf32, #tpu.memory_space<vmem>>, vector<1x128xf32>
    %c8_i32_12 = arith.constant 8 : i32
    %42 = arith.muli %arg0, %c8_i32_12 : i32
    %c7_i32 = arith.constant 7 : i32
    %43 = arith.addi %42, %c7_i32 : i32
    %44 = arith.index_cast %43 : i32 to index
    %45 = memref.load %arg1[%44] : memref<16xi32, #tpu.memory_space<smem>>
    %46 = arith.index_cast %45 : i32 to index
    %c0_13 = arith.constant 0 : index
    %47 = vector.load %arg2[%46, %c0_13] : memref<64x128xf32, #tpu.memory_space<vmem>>, vector<1x128xf32>
    %48 = tpu.concatenate %5, %11, %17, %23, %29, %35, %41, %47 in 0 : vector<1x128xf32>, vector<1x128xf32>, vector<1x128xf32>, vector<1x128xf32>, vector<1x128xf32>, vector<1x128xf32>, vector<1x128xf32>, vector<1x128xf32> -> vector<8x128xf32>
    %c0_14 = arith.constant 0 : index
    %c0_15 = arith.constant 0 : index
    %49 = vector.load %arg3[%c0_14, %c0_15] : memref<8x128xf32, #tpu.memory_space<vmem>>, vector<8x128xf32>
    %50 = arith.addf %48, %49 : vector<8x128xf32>
    %51 = vector.shape_cast %50 : vector<8x128xf32> to vector<1x8x128xf32>
    %c0_16 = arith.constant 0 : index
    %c0_17 = arith.constant 0 : index
    %c0_18 = arith.constant 0 : index
    %52 = vector.load %arg4[%c0_16, %c0_17, %c0_18] : memref<1x8x128xf32, #tpu.memory_space<vmem>>, vector<1x8x128xf32>
    tpu.vector_store %arg4[%c0_16, %c0_17, %c0_18], %51 {strides = array<i32>} : memref<1x8x128xf32, #tpu.memory_space<vmem>>, vector<1x8x128xf32>,
    return
  }
  func.func @transform_0(%arg0: i32, %arg1: memref<16xi32, #tpu.memory_space<smem>>) -> (i32, i32) {
    %c0_i32 = arith.constant 0 : i32
    %c0_i32_0 = arith.constant 0 : i32
    %c0_i32_1 = arith.constant 0 : i32
    return %c0_i32, %c0_i32_0 : i32, i32
  }
  func.func @transform_1(%arg0: i32, %arg1: memref<16xi32, #tpu.memory_space<smem>>) -> (i32, i32) {
    %c0_i32 = arith.constant 0 : i32
    %c0_i32_0 = arith.constant 0 : i32
    %c0_i32_1 = arith.constant 0 : i32
    return %c0_i32, %c0_i32_0 : i32, i32
  }
  func.func @transform_2(%arg0: i32, %arg1: memref<16xi32, #tpu.memory_space<smem>>) -> (i32, i32, i32) {
    %c0_i32 = arith.constant 0 : i32
    %c0_i32_0 = arith.constant 0 : i32
    %c0_i32_1 = arith.constant 0 : i32
    return %arg0, %c0_i32, %c0_i32_0 : i32, i32, i32
  }
}

</mosaic_0001>

<llo_original>
// kernel: tpu_custom_call.1
$region0: #{tpu_custom_call.1}
  #allocation0 [shape = 'u32[]', space=smem, size = 0x4, offset = 0x4, fixed_abs, tag = 'smem constant byte address 0x4 - core index']
  #allocation1 [shape = 'u32[72,128]{1,0:T(1,128)}', space=vmem, size = 0x9000, scoped, tag = 'internal scratch']
  #allocation2 [shape = 's32[1]{0}', space=sflag, size = 0x4, scoped, tag = 'scoped memory for tpu_custom_call.1']
  #allocation3 [shape = 'u8[512]{0}', space=smem, size = 0x200, scoped, tag = 'prefetched SMEM operand 0']
  %s0 = inlined_call_operand.hbm [shape: s32[16], index: 0, kind: input, shape index: {}]
  %s1 = inlined_call_operand.hbm [shape: f32[64,128], index: 1, kind: input, shape index: {}]
  %s2 = inlined_call_operand.hbm [shape: f32[8,128], index: 2, kind: input, shape index: {}]
  %s3 = inlined_call_operand.hbm [shape: f32[2,8,128], index: 3, kind: output, shape index: {}]
  %s4 = sld [smem:[#allocation0]]
  $region49: #{tpu_custom_call.1} parent=0
    _
  %s6 = ssub.s32 1, %s4
  %s7 = scalar_select 0, %s6, %s4
  %s9 = sshll.u32 %s0, 4
  %s10 = int_to_ptr.hbm [resolvable:$true] %s9
  %12 = dma.hbm_to_smem %s10, 16, [#allocation3], [#allocation2]
  %14 = dma.done [#allocation2], 16
  %15 = sfence
  $region1: #{tpu_custom_call.1} parent=0
    #allocation4 [shape = 'u8[32768]{0}', space=vmem, size = 0x8000, scoped, tag = 'input window, operand 1, single buffered']
    #allocation5 [shape = 's32[2]{0}', space=sflag, size = 0x8, scoped, tag = 'scoped memory for tpu_custom_call.1']
    #allocation6 [shape = 's32[2]{0}', space=sflag, size = 0x8, scoped, tag = 'scoped memory for tpu_custom_call.1']
    #allocation7 [shape = 'u8[4096]{0}', space=vmem, size = 0x1000, scoped, tag = 'input window, operand 2, single buffered']
    #allocation8 [shape = 's32[1]{0}', space=sflag, size = 0x4, scoped, tag = 'scoped memory for tpu_custom_call.1']
    #allocation9 [shape = 'u8[8192]{0}', space=vmem, size = 0x2000, scoped, tag = 'output window, operand 0']
    %16 = vsyncpa [#allocation5], 0
    %17 = vsyncpa [#allocation8], 0
    %18 = vsyncpa [#allocation6], 0
    %s19 = scalar_lea.sflag [#allocation6], 1
    %20 = vsyncpa %s19, 0
    loop: start=0, step=1, limit=4
    $region2: #{tpu_custom_call.1} parent=1 // loop_pre_header
      _
    $region3: #{tpu_custom_call.1} parent=1 // loop_header
      %s22 = sphi 0, %s26
      %p23 = scmp.ge.s32.totalorder %s22, 4
      %s30 = sphi 0, %s30
      %s32 = sphi 0, %s30
      %s33 = sphi 0, %s32
      %s47 = sphi 0, %s33
      %s51 = sphi 0, %s51
      %s53 = sphi 0, %s51
      %s54 = sphi 0, %s53
      %s68 = sphi 0, %s54
      %s74 = sphi 0, %s76
      %s77 = sphi 0, %s74
      %s78 = sphi 0, %s77
      %s94 = sphi 0, %s78
    $region4: #{tpu_custom_call.1} parent=1 // loop_header_branch
      %25 = sbr.rel (%p23) target = $region8
    $region5: #{tpu_custom_call.1} parent=1 // loop_body
      %s27 = ssub.s32 %s22, 1
      %s28 = ssub.s32 %s22, 2
      %s29 = sadd.s32 %s22, 1
      %s31 = sadd.s32 %s30, 1
      %p34 = scmp.eq.s32.totalorder %s22, 1
      %p35 = scmp.ne.s32.totalorder %s30, %s32
      %p36 = scmp.eq.s32.totalorder %s22, 0
      %p37 = por %p35, %p36
      %p38 = scmp.ne.s32.totalorder %s30, %s32
      %p39 = scmp.eq.s32.totalorder %s27, 1
      %p40 = por %p38, %p39
      %p41 = scmp.ne.s32.totalorder %s32, %s33
      %p42 = scmp.eq.s32.totalorder %s27, 0
      %p43 = por %p41, %p42
      %p44 = scmp.ne.s32.totalorder %s32, %s33
      %p45 = scmp.eq.s32.totalorder %s28, 1
      %p46 = por %p44, %p45
      %p48 = scmp.ne.s32.totalorder %s33, %s47
      %p49 = scmp.eq.s32.totalorder %s28, 0
      %p50 = por %p48, %p49
      %s52 = sadd.s32 %s51, 1
      %p55 = scmp.eq.s32.totalorder %s22, 1
      %p56 = scmp.ne.s32.totalorder %s51, %s53
      %p57 = scmp.eq.s32.totalorder %s22, 0
      %p58 = por %p56, %p57
      %p59 = scmp.ne.s32.totalorder %s51, %s53
      %p60 = scmp.eq.s32.totalorder %s27, 1
      %p61 = por %p59, %p60
      %p62 = scmp.ne.s32.totalorder %s53, %s54
      %p63 = scmp.eq.s32.totalorder %s27, 0
      %p64 = por %p62, %p63
      %p65 = scmp.ne.s32.totalorder %s53, %s54
      %p66 = scmp.eq.s32.totalorder %s28, 1
      %p67 = por %p65, %p66
      %p69 = scmp.ne.s32.totalorder %s54, %s68
      %p70 = scmp.eq.s32.totalorder %s28, 0
      %p71 = por %p69, %p70
      %s72 = ssub.s32 %s22, %s29
      %p73 = scmp.eq.s32.totalorder %s72, 0
      %s75 = sadd.s32 %s74, 1
      %s76 = scalar_select %p73, %s74, %s75
      %p79 = pneg %p73
      %p80 = scmp.eq.s32.totalorder %s22, 1
      %p81 = por %p79, %p80
      %p82 = scmp.ne.s32.totalorder %s74, %s77
      %p83 = scmp.eq.s32.totalorder %s22, 0
      %p84 = por %p82, %p83
      %p85 = scmp.ne.s32.totalorder %s74, %s77
      %p86 = scmp.eq.s32.totalorder %s27, 1
      %p87 = por %p85, %p86
      %p88 = scmp.ne.s32.totalorder %s77, %s78
      %p89 = scmp.eq.s32.totalorder %s27, 0
      %p90 = por %p88, %p89
      %p91 = scmp.ne.s32.totalorder %s77, %s78
      %p92 = scmp.eq.s32.totalorder %s28, 1
      %p93 = por %p91, %p92
      %p95 = scmp.ne.s32.totalorder %s78, %s94
      %p96 = scmp.eq.s32.totalorder %s28, 0
      %p97 = por %p95, %p96
      %p98 = scmp.le.s32.totalorder 1, %s22
      %p99 = scmp.lt.s32.totalorder %s22, 3
      %p100 = pnand %p98, %p99
      %p101 = pneg %p100
      // Predicated region
      $region9: #{tpu_custom_call.1} parent=5 // pred_check
        _
      $region10: #{tpu_custom_call.1} parent=5 // pred_check_branch
        %103 = sbr.rel (%p100) target = $region12
      $region11: #{tpu_custom_call.1} parent=5 // pred_region
        %s104 = ssub.s32 %s22, 1
        // Predicated region
        $region13: #{tpu_custom_call.1} parent=11 // pred_check
          %p105 = pneg %p43
        $region14: #{tpu_custom_call.1} parent=11 // pred_check_branch
          %107 = sbr.rel (%p105) target = $region16
        $region15: #{tpu_custom_call.1} parent=11 // pred_region
          %109 = vsyncadd [#allocation5], 0
          %s110 = sshll.u32 %s1, 4
          %s111 = int_to_ptr.hbm [resolvable:$true] %s110
          %s112 = sshll.u32 [#allocation4], 4
          %s113 = int_to_ptr.vmem [resolvable:$true] %s112
          %118 = dma.hbm_to_vmem [thread:$0]  %s111, 1024, %s113, [#allocation5], 128, 128, 8
        $region16: #{tpu_custom_call.1} parent=11 // pred_fallthru
          _
        // Predicated region
        $region17: #{tpu_custom_call.1} parent=11 // pred_check
          %p119 = pneg %p64
        $region18: #{tpu_custom_call.1} parent=11 // pred_check_branch
          %121 = sbr.rel (%p119) target = $region20
        $region19: #{tpu_custom_call.1} parent=11 // pred_region
          %123 = vsyncadd [#allocation8], 0
          %s125 = sshll.u32 %s2, 4
          %s126 = int_to_ptr.hbm [resolvable:$true] %s125
          %s127 = sshll.u32 [#allocation7], 4
          %s128 = int_to_ptr.vmem [resolvable:$true] %s127
          %130 = dma.hbm_to_vmem [thread:$0]  %s126, 128, %s128, [#allocation8]
        $region20: #{tpu_custom_call.1} parent=11 // pred_fallthru
          _
      $region12: #{tpu_custom_call.1} parent=5 // pred_fallthru
        _
      %p131 = scmp.lt.s32.totalorder %s22, 2
      // Predicated region
      $region21: #{tpu_custom_call.1} parent=5 // pred_check
        %p132 = pneg %p131
      $region22: #{tpu_custom_call.1} parent=5 // pred_check_branch
        %134 = sbr.rel (%p132) target = $region24
      $region23: #{tpu_custom_call.1} parent=5 // pred_region
        _
      $region24: #{tpu_custom_call.1} parent=5 // pred_fallthru
        _
      %p135 = scmp.le.s32.totalorder 1, %s22
      %p136 = scmp.lt.s32.totalorder %s22, 3
      %p137 = pnand %p135, %p136
      %p138 = pneg %p137
      // Predicated region
      $region25: #{tpu_custom_call.1} parent=5 // pred_check
        _
      $region26: #{tpu_custom_call.1} parent=5 // pred_check_branch
        %140 = sbr.rel (%p137) target = $region28
      $region27: #{tpu_custom_call.1} parent=5 // pred_region
        %s141 = ssub.s32 %s22, 1
        // Predicated region
        $region29: #{tpu_custom_call.1} parent=27 // pred_check
          %p142 = pneg %p43
        $region30: #{tpu_custom_call.1} parent=27 // pred_check_branch
          %144 = sbr.rel (%p142) target = $region32
        $region31: #{tpu_custom_call.1} parent=27 // pred_region
          %146 = dma.done [#allocation5], 1024
        $region32: #{tpu_custom_call.1} parent=27 // pred_fallthru
          _
        // Predicated region
        $region33: #{tpu_custom_call.1} parent=27 // pred_check
          %p147 = pneg %p64
        $region34: #{tpu_custom_call.1} parent=27 // pred_check_branch
          %149 = sbr.rel (%p147) target = $region36
        $region35: #{tpu_custom_call.1} parent=27 // pred_region
          %151 = dma.done [#allocation8], 128
        $region36: #{tpu_custom_call.1} parent=27 // pred_fallthru
          _
        %p152 = pneg %p43
        %p153 = pneg %p40
        %p154 = pneg %p64
        %p155 = pneg %p61
        %p156 = pneg %p90
        %p157 = pneg %p87
        %s158 = sand.u32 %s77, 1
        %s159 = scalar_lea.sflag [#allocation6], %s158
        %s160 = sand.u32 %s77, 1
        %s161 = smul.addr %s160, 8
        %s162 = scalar_lea.vmem [#allocation9], %s161
        %s163 = smul.u32 %s27, 8
        %s164 = sld [smem:[#allocation3 + %s163]]
        %s165 = scalar_lea.vmem [#allocation4], %s164
        %v166 = vld [vmem:[%s165] sm:$0x1]
        %s167 = sadd.s32 %s163, 1
        %s168 = sld [smem:[#allocation3 + %s167]]
        %s169 = scalar_lea.vmem [#allocation4], %s168
        %v170 = vld [vmem:[%s169] sm:$0x1]
        %s171 = sadd.s32 %s163, 2
        %s172 = sld [smem:[#allocation3 + %s171]]
        %s173 = scalar_lea.vmem [#allocation4], %s172
        %v174 = vld [vmem:[%s173] sm:$0x1]
        %s175 = sadd.s32 %s163, 3
        %s176 = sld [smem:[#allocation3 + %s175]]
        %s177 = scalar_lea.vmem [#allocation4], %s176
        %v178 = vld [vmem:[%s177] sm:$0x1]
        %s179 = sadd.s32 %s163, 4
        %s180 = sld [smem:[#allocation3 + %s179]]
        %s181 = scalar_lea.vmem [#allocation4], %s180
        %v182 = vld [vmem:[%s181] sm:$0x1]
        %s183 = sadd.s32 %s163, 5
        %s184 = sld [smem:[#allocation3 + %s183]]
        %s185 = scalar_lea.vmem [#allocation4], %s184
        %v186 = vld [vmem:[%s185] sm:$0x1]
        %s187 = sadd.s32 %s163, 6
        %s188 = sld [smem:[#allocation3 + %s187]]
        %s189 = scalar_lea.vmem [#allocation4], %s188
        %v190 = vld [vmem:[%s189] sm:$0x1]
        %s191 = sadd.s32 %s163, 7
        %s192 = sld [smem:[#allocation3 + %s191]]
        %s193 = scalar_lea.vmem [#allocation4], %s192
        %v194 = vld [vmem:[%s193] sm:$0x1]
        %v196 = vrot.slane %v170, 7
        %v199 = vrot.slane %v174, 6
        %v202 = vrot.slane %v178, 5
        %v205 = vrot.slane %v182, 4
        %v208 = vrot.slane %v186, 3
        %v211 = vrot.slane %v190, 2
        %v214 = vrot.slane %v194, 1
        %vm216 = vcmask 1040384
        %v217 = vsel %vm216, %v166, %v196
        %vm218 = vcmask 1041408
        %v219 = vsel %vm218, %v217, %v199
        %vm220 = vcmask 1042432
        %v221 = vsel %vm220, %v219, %v202
        %vm222 = vcmask 1043456
        %v223 = vsel %vm222, %v221, %v205
        %vm224 = vcmask 1044480
        %v225 = vsel %vm224, %v223, %v208
        %vm226 = vcmask 1045504
        %v227 = vsel %vm226, %v225, %v211
        %vm228 = vcmask 1046528
        %v229 = vsel %vm228, %v227, %v214
        %v230 = vld [vmem:[#allocation7] sm:$0xff]
        %v231 = vadd.f32 %v229, %v230
        %232 = vst [vmem:[%s162] sm:$0xff] %v231
        %s233 = sand.u32 %s77, 1
        %s234 = scalar_lea.sflag [#allocation6], %s233
        %s235 = sand.u32 %s77, 1
        %s236 = smul.addr %s235, 8
        %s237 = scalar_lea.vmem [#allocation9], %s236
        // Predicated region
        $region37: #{tpu_custom_call.1} parent=27 // pred_check
          %p238 = pneg %p87
        $region38: #{tpu_custom_call.1} parent=27 // pred_check_branch
          %240 = sbr.rel (%p238) target = $region40
        $region39: #{tpu_custom_call.1} parent=27 // pred_region
          %242 = vsyncadd %s234, 0
          %s243 = smul.addr %s27, 8
          %s244 = scalar_lea.hbm %s3, %s243
          %s246 = sshll.u32 %s237, 4
          %s247 = int_to_ptr.vmem [resolvable:$true] %s246
          %s248 = sshll.u32 %s244, 4
          %s249 = int_to_ptr.hbm [resolvable:$true] %s248
          %251 = dma.vmem_to_hbm [thread:$0]  %s247, 128, %s249, %s234
        $region40: #{tpu_custom_call.1} parent=27 // pred_fallthru
          _
      $region28: #{tpu_custom_call.1} parent=5 // pred_fallthru
        _
      %p252 = scmp.le.s32.totalorder 2, %s22
      // Predicated region
      $region41: #{tpu_custom_call.1} parent=5 // pred_check
        %p253 = pneg %p252
      $region42: #{tpu_custom_call.1} parent=5 // pred_check_branch
        %255 = sbr.rel (%p253) target = $region44
      $region43: #{tpu_custom_call.1} parent=5 // pred_region
        %s256 = ssub.s32 %s22, 2
        // Predicated region
        $region45: #{tpu_custom_call.1} parent=43 // pred_check
          %p257 = pneg %p93
        $region46: #{tpu_custom_call.1} parent=43 // pred_check_branch
          %259 = sbr.rel (%p257) target = $region48
        $region47: #{tpu_custom_call.1} parent=43 // pred_region
          %s260 = sand.u32 %s78, 1
          %s261 = scalar_lea.sflag [#allocation6], %s260
          %s262 = sand.u32 %s78, 1
          %s263 = smul.addr %s262, 8
          %s264 = scalar_lea.vmem [#allocation9], %s263
          %266 = dma.done %s261, 128
        $region48: #{tpu_custom_call.1} parent=43 // pred_fallthru
          _
      $region44: #{tpu_custom_call.1} parent=5 // pred_fallthru
        _
    $region6: #{tpu_custom_call.1} parent=1 // loop_footer
      %s26 = sadd.s32 1, %s22
    $region7: #{tpu_custom_call.1} parent=1 // loop_footer_branch
      %21 = sbr.rel target = $region3
    $region8: #{tpu_custom_call.1} parent=1 // loop_exit
      _
    %267 = vsyncpa [#allocation5], 1
    %s268 = scalar_lea.sflag [#allocation5], 1
    %269 = vsyncpa %s268, 1
    %270 = vsyncpa [#allocation8], 1
    %271 = vsyncpa [#allocation6], 1
    %s272 = scalar_lea.sflag [#allocation6], 1
    %273 = vsyncpa %s272, 1

</llo_original>
